<compile_context>
chip_gen: v7x
topology: tpu7x:2x2x1
jax: 0.10.0
libtpu: 0.0.40
codegen_flags: <defaults>
</compile_context>

<pallas_src>
import jax
import jax.numpy as jnp
from jax import lax
from jax.experimental import pallas as pl
from jax.experimental.pallas import tpu as pltpu


def _make_repvggdw_kernel(W, HW, PAD, CH):
    """Kernel factory; W, HW, PAD, CH are trace-time Python ints."""

    def kernel(x_ref, wb_ref, m_ref, o_ref, scr_ref):
        # x_ref : (1, cb, HW)        input tile (I/O dtype), flat spatial on lanes
        # wb_ref: (cb, 10)           f32: taps k = ky*3+kx (k=0..8) + bias (k=9)
        # m_ref : (2, HW)            f32 {0,1}: [0]=left-valid (w>0), [1]=right-valid (w<W-1)
        # o_ref : (1, cb, HW)        output tile
        # scr_ref: (cb, PAD+HW+PAD)  f32 zero-bordered flat plane
        cb = scr_ref.shape[0]
        L = scr_ref.shape[1]

        # Zero the two halo regions (2*PAD lanes per channel, cheap) and copy the
        # block into the interior at a lane-aligned offset, casting to f32.
        scr_ref[:, 0:PAD] = jnp.zeros((cb, PAD), jnp.float32)
        scr_ref[:, PAD + HW:L] = jnp.zeros((cb, L - PAD - HW), jnp.float32)
        scr_ref[:, PAD:PAD + HW] = x_ref[0].astype(jnp.float32)

        # Register-sized sub-tiles: <=8 channels x <=CH lanes, statically unrolled.
        for c0 in range(0, cb, 8):
            cs = min(8, cb - c0)

            def tap(k):
                # (cs, 1) per-channel scalar -> lane broadcast in the multiply.
                return wb_ref[c0:c0 + cs, k:k + 1]

            bias = wb_ref[c0:c0 + cs, 9:10]                    # (cs, 1)

            for j0 in range(0, HW, CH):
                ch = min(CH, HW - j0)

                def win(off):
                    s = PAD + j0 + off
                    return scr_ref[c0:c0 + cs, s:s + ch]       # (cs, ch) f32

                ml = m_ref[0:1, j0:j0 + ch]                    # (1, ch) sublane bcast
                mr = m_ref[1:2, j0:j0 + ch]

                # dx = -1 taps (k = 0, 3, 6): invalid where w == 0 -> masked once.
                acc = (win(-W - 1) * tap(0) + win(-1) * tap(3)
                       + win(W - 1) * tap(6)) * ml
                # dx = 0 taps (k = 1, 4, 7) + bias: always valid.
                acc = (acc + win(-W) * tap(1) + win(0) * tap(4)
                       + win(W) * tap(7) + bias)
                # dx = +1 taps (k = 2, 5, 8): invalid where w == W-1 -> masked once.
                acc = acc + (win(-W + 1) * tap(2) + win(1) * tap(5)
                             + win(W + 1) * tap(8)) * mr

                o_ref[0, c0:c0 + cs, j0:j0 + ch] = acc.astype(o_ref.dtype)

    return kernel


def _pick_channel_block(C, HW, itemsize, target_bytes=512 * 1024):
    """Channel-block size: ~target_bytes of input per grid step, and either the
    whole channel dim or a multiple of 8 that divides C (BlockSpec (8,128) rule)."""
    plane = HW * itemsize
    if C <= 8 or C * plane <= target_bytes:
        return C
    cb = min(C, max(8, target_bytes // plane))
    cb = max(8, (cb // 8) * 8)
    while cb > 8 and C % cb != 0:
        cb -= 8
    if cb < 8 or C % cb != 0:
        return C  # fallback: no clean multiple-of-8 divisor of C
    return cb


def repvggdw_pallas(x_nchw, taps, bias):
    """x_nchw: (N, C, H, W) in the module's native NCHW layout (any float dtype).
    taps: (C, 9) fused f32 taps (row-major ky*3 + kx); bias: (C,) fused f32 bias."""
    N, C, H, W = x_nchw.shape
    HW = H * W
    itemsize = jnp.dtype(x_nchw.dtype).itemsize
    cb = _pick_channel_block(C, HW, itemsize)
    n_cblk = C // cb

    PAD = ((W + 1 + 127) // 128) * 128   # lane-aligned halo, >= W+1 zeros per side
    CH = 1024                            # lane sub-chunk (multiple of 128)

    # Flatten spatial dims: free metadata reshape for row-major NCHW.
    x_flat = x_nchw.reshape(N, C, HW)

    # Taps + bias packed per channel: (C, 10) f32, channel on sublanes.
    wb = jnp.concatenate(
        [taps.astype(jnp.float32), bias.astype(jnp.float32)[:, None]], axis=1)

    # Horizontal-boundary lane masks over the flat plane (tiny, built once).
    col = jnp.arange(HW, dtype=jnp.int32) % W
    masks = jnp.stack([(col != 0).astype(jnp.float32),
                       (col != (W - 1)).astype(jnp.float32)], axis=0)   # (2, HW)

    # Explicit VMEM budget: double-buffered in/out blocks + params/masks + scratch.
    io_block = cb * HW * itemsize
    small = cb * 128 * 4 + 8 * ((HW + 127) // 128) * 128 * 4
    scr = cb * (2 * PAD + HW) * 4
    need = 4 * io_block + 2 * small + scr
    vmem_limit = int(min(64 * 1024 * 1024, max(16 * 1024 * 1024, 2 * need)))

    # NOTE: for extremely large spatial planes an additional spatial grid axis
    # (with halo overlap) would be needed; RepVGGDW in RepViT runs at modest
    # H*W, so full-plane blocks with channel blocking are sufficient here.
    kernel = _make_repvggdw_kernel(W, HW, PAD, CH)

    out_flat = pl.pallas_call(
        kernel,
        out_shape=jax.ShapeDtypeStruct((N, C, HW), x_nchw.dtype),
        grid_spec=pltpu.PrefetchScalarGridSpec(
            num_scalar_prefetch=0,
            grid=(N, n_cblk),
            in_specs=[
                pl.BlockSpec((1, cb, HW), lambda n, cj: (n, cj, 0)),
                pl.BlockSpec((cb, 10), lambda n, cj: (cj, 0)),
                pl.BlockSpec((2, HW), lambda n, cj: (0, 0)),
            ],
            out_specs=pl.BlockSpec((1, cb, HW), lambda n, cj: (n, cj, 0)),
            scratch_shapes=[pltpu.VMEM((cb, 2 * PAD + HW), jnp.float32)],
        ),
        compiler_params=pltpu.CompilerParams(
            dimension_semantics=("parallel", "parallel"),
            vmem_limit_bytes=vmem_limit,
        ),
    )(x_flat, wb, masks)

    return out_flat.reshape(N, C, H, W)


def build_fused_params(conv3_w, conv1_w,
                       bn3_w, bn3_b, bn3_mean, bn3_var,
                       bn1_w, bn1_b, bn1_mean, bn1_var,
                       eps=1e-5):
    """Fuse BN into the depthwise convs and fold (3x3 + 1x1 + identity) into one
    per-channel 3x3 stencil.  Returns ((C, 9) taps row-major ky*3+kx, (C,) bias)."""
    C = conv3_w.shape[0]
    s3 = bn3_w / jnp.sqrt(bn3_var + eps)           # (C,)
    s1 = bn1_w / jnp.sqrt(bn1_var + eps)           # (C,)

    w3 = conv3_w[:, 0, :, :] * s3[:, None, None]   # (C, 3, 3)
    b3 = bn3_b - bn3_mean * s3                     # (C,)
    w1 = conv1_w[:, 0, 0, 0] * s1                  # (C,)
    b1 = bn1_b - bn1_mean * s1                     # (C,)

    # conv(x) + conv1(x) + x  ==  single 3x3 depthwise with adjusted center tap.
    w3 = w3.at[:, 1, 1].add(w1 + 1.0)
    return w3.reshape(C, 9), b3 + b1


def repvggdw_reference(x, conv3_w, conv1_w,
                       bn3_w, bn3_b, bn3_mean, bn3_var,
                       bn1_w, bn1_b, bn1_mean, bn1_var, eps=1e-5):
    """Pure-JAX reference: conv(x) + conv1(x) + x with BN in eval mode, NCHW."""
    C = x.shape[1]

    def dwconv(x_, w_, pad):
        return lax.conv_general_dilated(
            x_, w_, window_strides=(1, 1), padding=((pad, pad), (pad, pad)),
            dimension_numbers=("NCHW", "OIHW", "NCHW"), feature_group_count=C)

    def bn(y, w_, b_, m_, v_):
        inv = w_ / jnp.sqrt(v_ + eps)
        return y * inv[None, :, None, None] + (b_ - m_ * inv)[None, :, None, None]

    y3 = bn(dwconv(x, conv3_w, 1), bn3_w, bn3_b, bn3_mean, bn3_var)
    y1 = bn(dwconv(x, conv1_w, 0), bn1_w, bn1_b, bn1_mean, bn1_var)
    return y3 + y1 + x


if __name__ == "__main__":
    # Module config: RepVGGDW(ed) with ed = C channels; input NCHW.
    N, C, H, W = 2, 4, 16, 16
    key = jax.random.PRNGKey(0)
    k_x, k_w3, k_w1, k_m3, k_v3, k_m1, k_v1 = jax.random.split(key, 7)

    x = jax.random.normal(k_x, (N, C, H, W), dtype=jnp.float32)

    # Conv2dBN(ed, ed, 3, 1, 1, groups=ed): depthwise 3x3, weight (C, 1, 3, 3), no conv bias.
    conv3_w = jax.random.normal(k_w3, (C, 1, 3, 3), dtype=jnp.float32) * 0.1
    # Conv2dBN(ed, ed, 1, 1, 0, groups=ed): depthwise 1x1, weight (C, 1, 1, 1).
    conv1_w = jax.random.normal(k_w1, (C, 1, 1, 1), dtype=jnp.float32) * 0.1

    # BatchNorm per Conv2dBN.__init__: weight=1, bias=0; running stats made
    # non-trivial deterministically so the BN fusion is actually exercised.
    bn3_w = jnp.ones((C,), jnp.float32)
    bn3_b = jnp.zeros((C,), jnp.float32)
    bn3_mean = jax.random.normal(k_m3, (C,), dtype=jnp.float32) * 0.05
    bn3_var = jnp.abs(jax.random.normal(k_v3, (C,), dtype=jnp.float32)) * 0.1 + 1.0
    bn1_w = jnp.ones((C,), jnp.float32)
    bn1_b = jnp.zeros((C,), jnp.float32)
    bn1_mean = jax.random.normal(k_m1, (C,), dtype=jnp.float32) * 0.05
    bn1_var = jnp.abs(jax.random.normal(k_v1, (C,), dtype=jnp.float32)) * 0.1 + 1.0

    taps, bias = build_fused_params(conv3_w, conv1_w,
                                    bn3_w, bn3_b, bn3_mean, bn3_var,
                                    bn1_w, bn1_b, bn1_mean, bn1_var)

    out = repvggdw_pallas(x, taps, bias)
    out = jax.block_until_ready(out)

    ref = repvggdw_reference(x, conv3_w, conv1_w,
                             bn3_w, bn3_b, bn3_mean, bn3_var,
                             bn1_w, bn1_b, bn1_mean, bn1_var)
    assert out.shape == (N, C, H, W)
    err = jnp.max(jnp.abs(out - ref))
    assert jnp.allclose(out, ref, atol=1e-4, rtol=1e-4), f"max abs err = {err}"

    print("KERNEL_OK")
</pallas_src>

<mosaic_0001>
module attributes {stable_mosaic.version = 11 : i64} {
  func.func @kernel(%arg0: i32, %arg1: i32, %arg2: memref<1x4x256xf32, #tpu.memory_space<vmem>>, %arg3: memref<4x10xf32, #tpu.memory_space<vmem>>, %arg4: memref<2x256xf32, #tpu.memory_space<vmem>>, %arg5: memref<1x4x256xf32, #tpu.memory_space<vmem>>, %arg6: memref<4x512xf32, #tpu.memory_space<vmem>>) attributes {dimension_semantics = [#tpu.dimension_semantics<parallel>, #tpu.dimension_semantics<parallel>], iteration_bounds = array<i64: 2, 1>, scalar_prefetch = 0 : i64, scratch_operands = 1 : i64, tpu.core_type = #tpu.core_type<tc>, window_params = [{transform_indices = @transform_0, window_bounds = array<i64: 1, 4, 256>}, {transform_indices = @transform_1, window_bounds = array<i64: 4, 10>}, {pipeline_mode = #tpu.pipeline_mode<synchronous>, transform_indices = @transform_2, window_bounds = array<i64: 2, 256>}, {transform_indices = @transform_3, window_bounds = array<i64: 1, 4, 256>}]} {
    %cst = arith.constant 0.000000e+00 : f32
    %0 = vector.broadcast %cst : f32 to vector<4x128xf32>
    %c0 = arith.constant 0 : index
    %c0_0 = arith.constant 0 : index
    %1 = vector.load %arg6[%c0, %c0_0] : memref<4x512xf32, #tpu.memory_space<vmem>>, vector<4x128xf32>
    tpu.vector_store %arg6[%c0, %c0_0], %0 {strides = array<i32>} : memref<4x512xf32, #tpu.memory_space<vmem>>, vector<4x128xf32>,
    %cst_1 = arith.constant 0.000000e+00 : f32
    %2 = vector.broadcast %cst_1 : f32 to vector<4x128xf32>
    %c0_2 = arith.constant 0 : index
    %c384 = arith.constant 384 : index
    %3 = vector.load %arg6[%c0_2, %c384] : memref<4x512xf32, #tpu.memory_space<vmem>>, vector<4x128xf32>
    tpu.vector_store %arg6[%c0_2, %c384], %2 {strides = array<i32>} : memref<4x512xf32, #tpu.memory_space<vmem>>, vector<4x128xf32>,
    %c0_3 = arith.constant 0 : index
    %c0_4 = arith.constant 0 : index
    %c0_5 = arith.constant 0 : index
    %4 = vector.load %arg2[%c0_3, %c0_4, %c0_5] : memref<1x4x256xf32, #tpu.memory_space<vmem>>, vector<1x4x256xf32>
    %5 = vector.shape_cast %4 : vector<1x4x256xf32> to vector<4x256xf32>
    %c0_6 = arith.constant 0 : index
    %c128 = arith.constant 128 : index
    %6 = vector.load %arg6[%c0_6, %c128] : memref<4x512xf32, #tpu.memory_space<vmem>>, vector<4x256xf32>
    tpu.vector_store %arg6[%c0_6, %c128], %5 {strides = array<i32>} : memref<4x512xf32, #tpu.memory_space<vmem>>, vector<4x256xf32>,
    %c0_7 = arith.constant 0 : index
    %c9 = arith.constant 9 : index
    %7 = vector.load %arg3[%c0_7, %c9] : memref<4x10xf32, #tpu.memory_space<vmem>>, vector<4x1xf32>
    %c0_8 = arith.constant 0 : index
    %c0_9 = arith.constant 0 : index
    %8 = vector.load %arg4[%c0_8, %c0_9] : memref<2x256xf32, #tpu.memory_space<vmem>>, vector<1x256xf32>
    %c1 = arith.constant 1 : index
    %c0_10 = arith.constant 0 : index
    %9 = vector.load %arg4[%c1, %c0_10] : memref<2x256xf32, #tpu.memory_space<vmem>>, vector<1x256xf32>
    %c0_11 = arith.constant 0 : index
    %c111 = arith.constant 111 : index
    %10 = vector.load %arg6[%c0_11, %c111] : memref<4x512xf32, #tpu.memory_space<vmem>>, vector<4x256xf32>
    %c0_12 = arith.constant 0 : index
    %c0_13 = arith.constant 0 : index
    %11 = vector.load %arg3[%c0_12, %c0_13] : memref<4x10xf32, #tpu.memory_space<vmem>>, vector<4x1xf32>
    %12 = vector.broadcast %11 : vector<4x1xf32> to vector<4x256xf32>
    %13 = arith.mulf %10, %12 : vector<4x256xf32>
    %c0_14 = arith.constant 0 : index
    %c127 = arith.constant 127 : index
    %14 = vector.load %arg6[%c0_14, %c127] : memref<4x512xf32, #tpu.memory_space<vmem>>, vector<4x256xf32>
    %c0_15 = arith.constant 0 : index
    %c3 = arith.constant 3 : index
    %15 = vector.load %arg3[%c0_15, %c3] : memref<4x10xf32, #tpu.memory_space<vmem>>, vector<4x1xf32>
    %16 = vector.broadcast %15 : vector<4x1xf32> to vector<4x256xf32>
    %17 = arith.mulf %14, %16 : vector<4x256xf32>
    %18 = arith.addf %13, %17 : vector<4x256xf32>
    %c0_16 = arith.constant 0 : index
    %c143 = arith.constant 143 : index
    %19 = vector.load %arg6[%c0_16, %c143] : memref<4x512xf32, #tpu.memory_space<vmem>>, vector<4x256xf32>
    %c0_17 = arith.constant 0 : index
    %c6 = arith.constant 6 : index
    %20 = vector.load %arg3[%c0_17, %c6] : memref<4x10xf32, #tpu.memory_space<vmem>>, vector<4x1xf32>
    %21 = vector.broadcast %20 : vector<4x1xf32> to vector<4x256xf32>
    %22 = arith.mulf %19, %21 : vector<4x256xf32>
    %23 = arith.addf %18, %22 : vector<4x256xf32>
    %24 = vector.broadcast %8 : vector<1x256xf32> to vector<4x256xf32>
    %25 = arith.mulf %23, %24 : vector<4x256xf32>
    %c0_18 = arith.constant 0 : index
    %c112 = arith.constant 112 : index
    %26 = vector.load %arg6[%c0_18, %c112] : memref<4x512xf32, #tpu.memory_space<vmem>>, vector<4x256xf32>
    %c0_19 = arith.constant 0 : index
    %c1_20 = arith.constant 1 : index
    %27 = vector.load %arg3[%c0_19, %c1_20] : memref<4x10xf32, #tpu.memory_space<vmem>>, vector<4x1xf32>
    %28 = vector.broadcast %27 : vector<4x1xf32> to vector<4x256xf32>
    %29 = arith.mulf %26, %28 : vector<4x256xf32>
    %30 = arith.addf %25, %29 : vector<4x256xf32>
    %c0_21 = arith.constant 0 : index
    %c128_22 = arith.constant 128 : index
    %31 = vector.load %arg6[%c0_21, %c128_22] : memref<4x512xf32, #tpu.memory_space<vmem>>, vector<4x256xf32>
    %c0_23 = arith.constant 0 : index
    %c4 = arith.constant 4 : index
    %32 = vector.load %arg3[%c0_23, %c4] : memref<4x10xf32, #tpu.memory_space<vmem>>, vector<4x1xf32>
    %33 = vector.broadcast %32 : vector<4x1xf32> to vector<4x256xf32>
    %34 = arith.mulf %31, %33 : vector<4x256xf32>
    %35 = arith.addf %30, %34 : vector<4x256xf32>
    %c0_24 = arith.constant 0 : index
    %c144 = arith.constant 144 : index
    %36 = vector.load %arg6[%c0_24, %c144] : memref<4x512xf32, #tpu.memory_space<vmem>>, vector<4x256xf32>
    %c0_25 = arith.constant 0 : index
    %c7 = arith.constant 7 : index
    %37 = vector.load %arg3[%c0_25, %c7] : memref<4x10xf32, #tpu.memory_space<vmem>>, vector<4x1xf32>
    %38 = vector.broadcast %37 : vector<4x1xf32> to vector<4x256xf32>
    %39 = arith.mulf %36, %38 : vector<4x256xf32>
    %40 = arith.addf %35, %39 : vector<4x256xf32>
    %41 = vector.broadcast %7 : vector<4x1xf32> to vector<4x256xf32>
    %42 = arith.addf %40, %41 : vector<4x256xf32>
    %c0_26 = arith.constant 0 : index
    %c113 = arith.constant 113 : index
    %43 = vector.load %arg6[%c0_26, %c113] : memref<4x512xf32, #tpu.memory_space<vmem>>, vector<4x256xf32>
    %c0_27 = arith.constant 0 : index
    %c2 = arith.constant 2 : index
    %44 = vector.load %arg3[%c0_27, %c2] : memref<4x10xf32, #tpu.memory_space<vmem>>, vector<4x1xf32>
    %45 = vector.broadcast %44 : vector<4x1xf32> to vector<4x256xf32>
    %46 = arith.mulf %43, %45 : vector<4x256xf32>
    %c0_28 = arith.constant 0 : index
    %c129 = arith.constant 129 : index
    %47 = vector.load %arg6[%c0_28, %c129] : memref<4x512xf32, #tpu.memory_space<vmem>>, vector<4x256xf32>
    %c0_29 = arith.constant 0 : index
    %c5 = arith.constant 5 : index
    %48 = vector.load %arg3[%c0_29, %c5] : memref<4x10xf32, #tpu.memory_space<vmem>>, vector<4x1xf32>
    %49 = vector.broadcast %48 : vector<4x1xf32> to vector<4x256xf32>
    %50 = arith.mulf %47, %49 : vector<4x256xf32>
    %51 = arith.addf %46, %50 : vector<4x256xf32>
    %c0_30 = arith.constant 0 : index
    %c145 = arith.constant 145 : index
    %52 = vector.load %arg6[%c0_30, %c145] : memref<4x512xf32, #tpu.memory_space<vmem>>, vector<4x256xf32>
    %c0_31 = arith.constant 0 : index
    %c8 = arith.constant 8 : index
    %53 = vector.load %arg3[%c0_31, %c8] : memref<4x10xf32, #tpu.memory_space<vmem>>, vector<4x1xf32>
    %54 = vector.broadcast %53 : vector<4x1xf32> to vector<4x256xf32>
    %55 = arith.mulf %52, %54 : vector<4x256xf32>
    %56 = arith.addf %51, %55 : vector<4x256xf32>
    %57 = vector.broadcast %9 : vector<1x256xf32> to vector<4x256xf32>
    %58 = arith.mulf %56, %57 : vector<4x256xf32>
    %59 = arith.addf %42, %58 : vector<4x256xf32>
    %c0_32 = arith.constant 0 : index
    %c0_33 = arith.constant 0 : index
    %c0_34 = arith.constant 0 : index
    %60 = vector.load %arg5[%c0_32, %c0_33, %c0_34] : memref<1x4x256xf32, #tpu.memory_space<vmem>>, vector<1x4x256xf32>
    %61 = vector.shape_cast %60 : vector<1x4x256xf32> to vector<4x256xf32>
    %62 = vector.shape_cast %59 : vector<4x256xf32> to vector<1x4x256xf32>
    tpu.vector_store %arg5[%c0_32, %c0_33, %c0_34], %62 {strides = array<i32>} : memref<1x4x256xf32, #tpu.memory_space<vmem>>, vector<1x4x256xf32>,
    return
  }
  func.func @transform_0(%arg0: i32, %arg1: i32) -> (i32, i32, i32) {
    %c0_i32 = arith.constant 0 : i32
    %c0_i32_0 = arith.constant 0 : i32
    return %arg0, %arg1, %c0_i32 : i32, i32, i32
  }
  func.func @transform_1(%arg0: i32, %arg1: i32) -> (i32, i32) {
    %c0_i32 = arith.constant 0 : i32
    %c0_i32_0 = arith.constant 0 : i32
    return %arg1, %c0_i32 : i32, i32
  }
  func.func @transform_2(%arg0: i32, %arg1: i32) -> (i32, i32) {
    %c0_i32 = arith.constant 0 : i32
    %c0_i32_0 = arith.constant 0 : i32
    %c0_i32_1 = arith.constant 0 : i32
    return %c0_i32, %c0_i32_0 : i32, i32
  }
  func.func @transform_3(%arg0: i32, %arg1: i32) -> (i32, i32, i32) {
    %c0_i32 = arith.constant 0 : i32
    %c0_i32_0 = arith.constant 0 : i32
    return %arg0, %arg1, %c0_i32 : i32, i32, i32
  }
}

</mosaic_0001>

<llo_original>
// kernel: tpu_custom_call.1
$region0: #{tpu_custom_call.1}
  #allocation0 [shape = 'u32[]', space=smem, size = 0x4, offset = 0x4, fixed_abs, tag = 'smem constant byte address 0x4 - core index']
  #allocation1 [shape = 'u32[144,128]{1,0:T(1,128)}', space=vmem, size = 0x12000, scoped, tag = 'internal scratch']
  #allocation2 [shape = 'f32[4,512]{1,0:T(4,128)}', space=vmem, size = 0x2000, scoped, tag = 'scratch operand']
  %s0 = inlined_call_operand.hbm [shape: f32[2,4,256], index: 0, kind: input, shape index: {}]
  %s1 = inlined_call_operand.hbm [shape: f32[4,10], index: 1, kind: input, shape index: {}]
  %s2 = inlined_call_operand.vmem [shape: f32[2,256], index: 2, kind: input, shape index: {}]
  %s3 = inlined_call_operand.hbm [shape: f32[2,4,256], index: 3, kind: output, shape index: {}]
  %s4 = sld [smem:[#allocation0]]
  $region53: #{tpu_custom_call.1} parent=0
    _
  %s6 = ssub.s32 1, %s4
  %s7 = scalar_select 0, %s6, %s4
  $region1: #{tpu_custom_call.1} parent=0
    #allocation3 [shape = 'u8[8192]{0}', space=vmem, size = 0x2000, scoped, tag = 'input window, operand 0']
    #allocation4 [shape = 's32[2]{0}', space=sflag, size = 0x8, scoped, tag = 'scoped memory for tpu_custom_call.1']
    #allocation5 [shape = 's32[2]{0}', space=sflag, size = 0x8, scoped, tag = 'scoped memory for tpu_custom_call.1']
    #allocation6 [shape = 'u8[2048]{0}', space=vmem, size = 0x800, scoped, tag = 'input window, operand 1, single buffered']
    #allocation7 [shape = 's32[1]{0}', space=sflag, size = 0x4, scoped, tag = 'scoped memory for tpu_custom_call.1']
    #allocation8 [shape = 'u8[8192]{0}', space=vmem, size = 0x2000, scoped, tag = 'output window, operand 0']
    %8 = vsyncpa [#allocation4], 0
    %s9 = scalar_lea.sflag [#allocation4], 1
    %10 = vsyncpa %s9, 0
    %11 = vsyncpa [#allocation7], 0
    %12 = vsyncpa [#allocation5], 0
    %s13 = scalar_lea.sflag [#allocation5], 1
    %14 = vsyncpa %s13, 0
    loop: start=0, step=1, limit=4
    $region2: #{tpu_custom_call.1} parent=1 // loop_pre_header
      _
    $region3: #{tpu_custom_call.1} parent=1 // loop_header
      %s16 = sphi 0, %s20
      %p17 = scmp.ge.s32.totalorder %s16, 4
      %s23 = sphi 0, %s35
      %s24 = sphi 0, %s31
      %s25 = sphi 0, %s23
      %s26 = sphi 0, %s24
      %s27 = sphi 0, %s25
      %s28 = sphi 0, %s26
      %s40 = sphi 0, %s42
      %s43 = sphi 0, %s40
      %s44 = sphi 0, %s43
      %s60 = sphi 0, %s44
      %s66 = sphi 0, %s68
      %s69 = sphi 0, %s66
      %s70 = sphi 0, %s69
      %s86 = sphi 0, %s70
      %s90 = sphi 0, %s90
      %s92 = sphi 0, %s90
      %s93 = sphi 0, %s92
      %s107 = sphi 0, %s93
      %s115 = sphi 0, %s117
      %s118 = sphi 0, %s115
      %s119 = sphi 0, %s118
      %s135 = sphi 0, %s119
    $region4: #{tpu_custom_call.1} parent=1 // loop_header_branch
      %19 = sbr.rel (%p17) target = $region8
    $region5: #{tpu_custom_call.1} parent=1 // loop_body
      %s21 = ssub.s32 %s16, 1
      %s22 = ssub.s32 %s16, 2
      %s29 = sadd.s32 1, %s24
      %p30 = scmp.ge.s32.totalorder %s29, 1
      %s31 = scalar_select %p30, 0, %s29
      %s32 = sadd.s32 1, %s23
      %s33 = scalar_select %p30, %s32, %s23
      %p34 = scmp.ge.s32.totalorder %s33, 2
      %s35 = scalar_select %p34, 0, %s33
      %s36 = ssub.s32 %s23, %s35
      %s37 = ssub.s32 %s24, %s31
      %s38 = sor.u32 %s36, %s37
      %p39 = scmp.eq.s32.totalorder %s38, 0
      %s41 = sadd.s32 %s40, 1
      %s42 = scalar_select %p39, %s40, %s41
      %p45 = pneg %p39
      %p46 = scmp.eq.s32.totalorder %s16, 1
      %p47 = por %p45, %p46
      %p48 = scmp.ne.s32.totalorder %s40, %s43
      %p49 = scmp.eq.s32.totalorder %s16, 0
      %p50 = por %p48, %p49
      %p51 = scmp.ne.s32.totalorder %s40, %s43
      %p52 = scmp.eq.s32.totalorder %s21, 1
      %p53 = por %p51, %p52
      %p54 = scmp.ne.s32.totalorder %s43, %s44
      %p55 = scmp.eq.s32.totalorder %s21, 0
      %p56 = por %p54, %p55
      %p57 = scmp.ne.s32.totalorder %s43, %s44
      %p58 = scmp.eq.s32.totalorder %s22, 1
      %p59 = por %p57, %p58
      %p61 = scmp.ne.s32.totalorder %s44, %s60
      %p62 = scmp.eq.s32.totalorder %s22, 0
      %p63 = por %p61, %p62
      %s64 = ssub.s32 %s24, %s31
      %p65 = scmp.eq.s32.totalorder %s64, 0
      %s67 = sadd.s32 %s66, 1
      %s68 = scalar_select %p65, %s66, %s67
      %p71 = pneg %p65
      %p72 = scmp.eq.s32.totalorder %s16, 1
      %p73 = por %p71, %p72
      %p74 = scmp.ne.s32.totalorder %s66, %s69
      %p75 = scmp.eq.s32.totalorder %s16, 0
      %p76 = por %p74, %p75
      %p77 = scmp.ne.s32.totalorder %s66, %s69
      %p78 = scmp.eq.s32.totalorder %s21, 1
      %p79 = por %p77, %p78
      %p80 = scmp.ne.s32.totalorder %s69, %s70
      %p81 = scmp.eq.s32.totalorder %s21, 0
      %p82 = por %p80, %p81
      %p83 = scmp.ne.s32.totalorder %s69, %s70
      %p84 = scmp.eq.s32.totalorder %s22, 1
      %p85 = por %p83, %p84
      %p87 = scmp.ne.s32.totalorder %s70, %s86
      %p88 = scmp.eq.s32.totalorder %s22, 0
      %p89 = por %p87, %p88
      %s91 = sadd.s32 %s90, 1
      %p94 = scmp.eq.s32.totalorder %s16, 1
      %p95 = scmp.ne.s32.totalorder %s90, %s92
      %p96 = scmp.eq.s32.totalorder %s16, 0
      %p97 = por %p95, %p96
      %p98 = scmp.ne.s32.totalorder %s90, %s92
      %p99 = scmp.eq.s32.totalorder %s21, 1
      %p100 = por %p98, %p99
      %p101 = scmp.ne.s32.totalorder %s92, %s93
      %p102 = scmp.eq.s32.totalorder %s21, 0
      %p103 = por %p101, %p102
      %p104 = scmp.ne.s32.totalorder %s92, %s93
      %p105 = scmp.eq.s32.totalorder %s22, 1
      %p106 = por %p104, %p105
      %p108 = scmp.ne.s32.totalorder %s93, %s107
      %p109 = scmp.eq.s32.totalorder %s22, 0
      %p110 = por %p108, %p109
      %s111 = ssub.s32 %s23, %s35
      %s112 = ssub.s32 %s24, %s31
      %s113 = sor.u32 %s111, %s112
      %p114 = scmp.eq.s32.totalorder %s113, 0
      %s116 = sadd.s32 %s115, 1
      %s117 = scalar_select %p114, %s115, %s116
      %p120 = pneg %p114
      %p121 = scmp.eq.s32.totalorder %s16, 1
      %p122 = por %p120, %p121
      %p123 = scmp.ne.s32.totalorder %s115, %s118
      %p124 = scmp.eq.s32.totalorder %s16, 0
      %p125 = por %p123, %p124
      %p126 = scmp.ne.s32.totalorder %s115, %s118
      %p127 = scmp.eq.s32.totalorder %s21, 1
      %p128 = por %p126, %p127
      %p129 = scmp.ne.s32.totalorder %s118, %s119
      %p130 = scmp.eq.s32.totalorder %s21, 0
      %p131 = por %p129, %p130
      %p132 = scmp.ne.s32.totalorder %s118, %s119
      %p133 = scmp.eq.s32.totalorder %s22, 1
      %p134 = por %p132, %p133
      %p136 = scmp.ne.s32.totalorder %s119, %s135
      %p137 = scmp.eq.s32.totalorder %s22, 0
      %p138 = por %p136, %p137
      %p139 = scmp.le.s32.totalorder 1, %s16
      %p140 = scmp.lt.s32.totalorder %s16, 3
      %p141 = pnand %p139, %p140
      %p142 = pneg %p141
      // Predicated region
      $region9: #{tpu_custom_call.1} parent=5 // pred_check
        _
      $region10: #{tpu_custom_call.1} parent=5 // pred_check_branch
        %144 = sbr.rel (%p141) target = $region12
      $region11: #{tpu_custom_call.1} parent=5 // pred_region
        %s145 = ssub.s32 %s16, 1
        // Predicated region
        $region13: #{tpu_custom_call.1} parent=11 // pred_check
          %p146 = pneg %p82
        $region14: #{tpu_custom_call.1} parent=11 // pred_check_branch
          %148 = sbr.rel (%p146) target = $region16
        $region15: #{tpu_custom_call.1} parent=11 // pred_region
          %s150 = ssub.s32 64, 64
          %151 = vsyncadd [#allocation7], %s150
          %s152 = smul.addr %s26, 64
          %s153 = scalar_lea.hbm %s1, %s152
          %s155 = sshll.u32 [#allocation6], 4
          %s156 = int_to_ptr.vmem [resolvable:$true] %s155
          %158 = dma.hbm_to_vmem [thread:$0]  %s153, 64, %s156, [#allocation7]
        $region16: #{tpu_custom_call.1} parent=11 // pred_fallthru
          _
        // Predicated region
        $region17: #{tpu_custom_call.1} parent=11 // pred_check
          %p159 = pneg %p103
        $region18: #{tpu_custom_call.1} parent=11 // pred_check_branch
          %161 = sbr.rel (%p159) target = $region20
        $region19: #{tpu_custom_call.1} parent=11 // pred_region
          _
        $region20: #{tpu_custom_call.1} parent=11 // pred_fallthru
          _
      $region12: #{tpu_custom_call.1} parent=5 // pred_fallthru
        _
      %p162 = scmp.lt.s32.totalorder %s16, 2
      // Predicated region
      $region21: #{tpu_custom_call.1} parent=5 // pred_check
        %p163 = pneg %p162
      $region22: #{tpu_custom_call.1} parent=5 // pred_check_branch
        %165 = sbr.rel (%p163) target = $region24
      $region23: #{tpu_custom_call.1} parent=5 // pred_region
        // Predicated region
        $region25: #{tpu_custom_call.1} parent=23 // pred_check
          %p166 = pneg %p50
        $region26: #{tpu_custom_call.1} parent=23 // pred_check_branch
          %168 = sbr.rel (%p166) target = $region28
        $region27: #{tpu_custom_call.1} parent=23 // pred_region
          %s169 = sand.u32 %s40, 1
          %s170 = scalar_lea.sflag [#allocation4], %s169
          %s171 = sand.u32 %s40, 1
          %s172 = smul.addr %s171, 8
          %s173 = scalar_lea.vmem [#allocation3], %s172
          %s175 = ssub.s32 128, 128
          %176 = vsyncadd %s170, %s175
          %s177 = smul.addr %s24, 2
          %s178 = smul.addr %s23, 2
          %s179 = sadd.s32 %s177, %s178
          %s180 = smul.addr %s179, 64
          %s181 = scalar_lea.hbm %s0, %s180
          %s183 = sshll.u32 %s173, 4
          %s184 = int_to_ptr.vmem [resolvable:$true] %s183
          %186 = dma.hbm_to_vmem [thread:$0]  %s181, 128, %s184, %s170
        $region28: #{tpu_custom_call.1} parent=23 // pred_fallthru
          _
      $region24: #{tpu_custom_call.1} parent=5 // pred_fallthru
        _
      %p187 = scmp.le.s32.totalorder 1, %s16
      %p188 = scmp.lt.s32.totalorder %s16, 3
      %p189 = pnand %p187, %p188
      %p190 = pneg %p189
      // Predicated region
      $region29: #{tpu_custom_call.1} parent=5 // pred_check
        _
      $region30: #{tpu_custom_call.1} parent=5 // pred_check_branch
        %192 = sbr.rel (%p189) target = $region32
      $region31: #{tpu_custom_call.1} parent=5 // pred_region
        %s193 = ssub.s32 %s16, 1
        %s194 = sand.u32 %s43, 1
        %s195 = scalar_lea.sflag [#allocation4], %s194
        %s196 = sand.u32 %s43, 1
        %s197 = smul.addr %s196, 8
        %s198 = scalar_lea.vmem [#allocation3], %s197
        // Predicated region
        $region33: #{tpu_custom_call.1} parent=31 // pred_check
          %p199 = pneg %p56
        $region34: #{tpu_custom_call.1} parent=31 // pred_check_branch
          %201 = sbr.rel (%p199) target = $region36
        $region35: #{tpu_custom_call.1} parent=31 // pred_region
          %202 = dma.done %s195, 128
        $region36: #{tpu_custom_call.1} parent=31 // pred_fallthru
          _
        // Predicated region
        $region37: #{tpu_custom_call.1} parent=31 // pred_check
          %p203 = pneg %p82
        $region38: #{tpu_custom_call.1} parent=31 // pred_check_branch
          %205 = sbr.rel (%p203) target = $region40
        $region39: #{tpu_custom_call.1} parent=31 // pred_region
          %206 = dma.done [#allocation7], 64
        $region40: #{tpu_custom_call.1} parent=31 // pred_fallthru
          _
        %s207 = sand.u32 %s43, 1
        %s208 = scalar_lea.sflag [#allocation4], %s207
        %s209 = sand.u32 %s43, 1
        %s210 = smul.addr %s209, 8
        %s211 = scalar_lea.vmem [#allocation3], %s210
        %p212 = pneg %p56
        %p213 = pneg %p53
        %p214 = pneg %p82
        %p215 = pneg %p79
        %p216 = pneg %p103
        %p217 = pneg %p100
        %p218 = pneg %p131
        %p219 = pneg %p128
        %s220 = sand.u32 %s118, 1
        %s221 = scalar_lea.sflag [#allocation5], %s220
        %s222 = sand.u32 %s118, 1
        %s223 = smul.addr %s222, 8
        %s224 = scalar_lea.vmem [#allocation8], %s223
        %225 = vst [vmem:[#allocation2] sm:$0xf] 0.0
        %226 = vst [vmem:[#allocation2 + $0xc] sm:$0xf] 0.0
        %v227 = vld [vmem:[%s198] sm:$0xff]
        %228 = vst [vmem:[#allocation2 + $0x4] sm:$0xff] %v227
        %v229 = vld [vmem:[#allocation6] sm:$0xf]
        %v230 = vld [vmem:[%s2] ss:$2 sm:$0x3]
        %s231 = scalar_lea.vmem %s2, 1
        %v232 = vld [vmem:[%s231] ss:$2 sm:$0x3]
        %v233 = vld [vmem:[#allocation2] sm:$0xff]
        %v234 = vld [vmem:[#allocation2 + $0x8] sm:$0xf]
        %236 = vset.pattern.permute.xlu0 0
        %237 = vperm.xlu0 %236, %v229
        %v238 = vpop.permute.xlu0 %237
        %v240 = vunpack.c.l.s4 839922192
        %v241 = vunpack.c.0.s8 %v240
        %v242 = vlaneseq
        %v243 = vshrl.u32 %v242, 7
        %v244 = vsub.s32 %v241, %v243
        %v245 = vrot.slane %v238, %v244
        %v247 = vmul.f32 %v233, %v245
        %v248 = vmul.f32 %v234, %v245
        %249 = vset.pattern.permute.xlu0 3
        %250 = vperm.xlu0 %249, %v229
        %v251 = vpop.permute.xlu0 %250
        %v253 = vunpack.c.l.s4 839922192
        %v254 = vunpack.c.0.s8 %v253
        %v255 = vlaneseq
        %v256 = vshrl.u32 %v255, 7
        %v257 = vsub.s32 %v254, %v256
        %v258 = vrot.slane %v251, %v257
        %v260 = vmul.f32 %v233, %v258
        %v261 = vmul.f32 %v234, %v258
        %264 = vrot.lane.b32.xlu0 %v260, 112
        %v265 = vpop.permute.xlu0 %264
        %266 = vrot.lane.b32.xlu0 %v261, 112
        %v267 = vpop.permute.xlu0 %266
        %v268 = vrot.slane %v265, 4
        %v269 = vrot.slane %v267, 4
        %vm270 = vcmask 1043456
        %v271 = vsel %vm270, %v268, %v269
        %vm272 = vcmask 916480
        %v273 = vsel %vm272, %v265, %v271
        %v276 = vadd.f32 %v247, %v273
        %v277 = vadd.f32 %v248, %v267
        %v278 = vld [vmem:[#allocation2 + $0x4] sm:$0xff]
        %v279 = vld [vmem:[#allocation2 + $0xc] sm:$0xf]
        %280 = vset.pattern.permute.xlu0 6
        %281 = vperm.xlu0 %280, %v229
        %v282 = vpop.permute.xlu0 %281
        %v284 = vunpack.c.l.s4 839922192
        %v285 = vunpack.c.0.s8 %v284
        %v286 = vlaneseq
        %v287 = vshrl.u32 %v286, 7
        %v288 = vsub.s32 %v285, %v287
        %v289 = vrot.slane %v282, %v288
        %v291 = vmul.f32 %v278, %v289
        %v292 = vmul.f32 %v279, %v289
        %295 = vrot.lane.b32.xlu0 %v291, 96
        %v296 = vpop.permute.xlu0 %295
        %297 = vrot.lane.b32.xlu0 %v292, 96
        %v298 = vpop.permute.xlu0 %297
        %v299 = vrot.slane %v296, 4
        %vm300 = vcmask 785408
        %v301 = vsel %vm300, %v299, %v296
        %v302 = vsel %vm300, %v299, %v298
        %v305 = vadd.f32 %v276, %v301
        %v306 = vadd.f32 %v277, %v302
        %v308 = vlaneseq
        %v309 = vshrl.u32 %v308, 7
        %v310 = vsub.s32 0, %v309
        %v311 = vrot.slane %v230, %v310
        %v312 = vlaneseq
        %v313 = vshrl.u32 %v312, 7
        %v314 = vsub.s32 1, %v313
        %v315 = vrot.slane %v230, %v314
        %v316 = vcombine.low %v311, %v315
        %317 = vrot.lane.b32.xlu0 %v316, 111
        %v318 = vpop.permute.xlu0 %317
        %v319 = vrot.slane %v318, 4
        %vm320 = vcmask 908288
        %v321 = vsel %vm320, %v319, %v318
        %v324 = vmul.f32 %v305, %v321
        %v325 = vmul.f32 %v306, %v319
        %v326 = vld [vmem:[#allocation2] sm:$0xff]
        %v327 = vld [vmem:[#allocation2 + $0x8] sm:$0xf]
        %v328 = vld [vmem:[#allocation6] sm:$0xf]
        %330 = vset.pattern.permute.xlu0 1
        %331 = vperm.xlu0 %330, %v328
        %v332 = vpop.permute.xlu0 %331
        %v334 = vunpack.c.l.s4 839922192
        %v335 = vunpack.c.0.s8 %v334
        %v336 = vlaneseq
        %v337 = vshrl.u32 %v336, 7
        %v338 = vsub.s32 %v335, %v337
        %v339 = vrot.slane %v332, %v338
        %v341 = vmul.f32 %v326, %v339
        %v342 = vmul.f32 %v327, %v339
        %345 = vrot.lane.b32.xlu0 %v341, 127
        %v346 = vpop.permute.xlu0 %345
        %347 = vrot.lane.b32.xlu0 %v342, 127
        %v348 = vpop.permute.xlu0 %347
        %v349 = vrot.slane %v346, 4
        %v350 = vrot.slane %v348, 4
        %v351 = vsel %vm270, %v349, %v350
        %vm352 = vcmask 1039360
        %v353 = vsel %vm352, %v346, %v351
        %v356 = vadd.f32 %v324, %v353
        %v357 = vadd.f32 %v325, %v348
        %v358 = vld [vmem:[#allocation2 + $0x4] sm:$0xff]
        %359 = vset.pattern.permute.xlu0 4
        %360 = vperm.xlu0 %359, %v328
        %v361 = vpop.permute.xlu0 %360
        %v363 = vunpack.c.l.s4 839922192
        %v364 = vunpack.c.0.s8 %v363
        %v365 = vlaneseq
        %v366 = vshrl.u32 %v365, 7
        %v367 = vsub.s32 %v364, %v366
        %v368 = vrot.slane %v361, %v367
        %v370 = vmul.f32 %v358, %v368
        %372 = vrot.lane.b32.xlu0 %v370, 111
        %v373 = vpop.permute.xlu0 %372
        %v374 = vrot.slane %v373, 4
        %v375 = vsel %vm320, %v374, %v373
        %v378 = vadd.f32 %v356, %v375
        %v379 = vadd.f32 %v357, %v374
        %v380 = vld [vmem:[#allocation2 + $0x4] sm:$0xff]
        %v381 = vld [vmem:[#allocation2 + $0xc] sm:$0xf]
        %382 = vset.pattern.permute.xlu0 7
        %383 = vperm.xlu0 %382, %v328
        %v384 = vpop.permute.xlu0 %383
        %v386 = vunpack.c.l.s4 839922192
        %v387 = vunpack.c.0.s8 %v386
        %v388 = vlaneseq
        %v389 = vshrl.u32 %v388, 7
        %v390 = vsub.s32 %v387, %v389
        %v391 = vrot.slane %v384, %v390
        %v393 = vmul.f32 %v380, %v391
        %v394 = vmul.f32 %v381, %v391
        %397 = vrot.lane.b32.xlu0 %v393, 95
        %v398 = vpop.permute.xlu0 %397
        %399 = vrot.lane.b32.xlu0 %v394, 95
        %v400 = vpop.permute.xlu0 %399
        %v401 = vrot.slane %v398, 4
        %vm402 = vcmask 777216
        %v403 = vsel %vm402, %v401, %v398
        %v404 = vsel %vm402, %v401, %v400
        %v407 = vadd.f32 %v378, %v403
        %v408 = vadd.f32 %v379, %v404
        %409 = vset.pattern.permute.xlu0 9
        %410 = vperm.xlu0 %409, %v229
        %v411 = vpop.permute.xlu0 %410
        %v413 = vunpack.c.l.s4 839922192
        %v414 = vunpack.c.0.s8 %v413
        %v415 = vlaneseq
        %v416 = vshrl.u32 %v415, 7
        %v417 = vsub.s32 %v414, %v416
        %v418 = vrot.slane %v411, %v417
        %v420 = vadd.f32 %v407, %v418
        %v421 = vadd.f32 %v408, %v418
        %422 = vset.pattern.permute.xlu0 2
        %423 = vperm.xlu0 %422, %v328
        %v424 = vpop.permute.xlu0 %423
        %v426 = vunpack.c.l.s4 839922192
        %v427 = vunpack.c.0.s8 %v426
        %v428 = vlaneseq
        %v429 = vshrl.u32 %v428, 7
        %v430 = vsub.s32 %v427, %v429
        %v431 = vrot.slane %v424, %v430
        %v433 = vmul.f32 %v326, %v431
        %v434 = vmul.f32 %v327, %v431
        %435 = vset.pattern.permute.xlu0 5
        %436 = vperm.xlu0 %435, %v328
        %v437 = vpop.permute.xlu0 %436
        %v439 = vunpack.c.l.s4 839922192
        %v440 = vunpack.c.0.s8 %v439
        %v441 = vlaneseq
        %v442 = vshrl.u32 %v441, 7
        %v443 = vsub.s32 %v440, %v442
        %v444 = vrot.slane %v437, %v443
        %v446 = vmul.f32 %v380, %v444
        %v447 = vmul.f32 %v381, %v444
        %450 = vrot.lane.b32.xlu0 %v446, 112
        %v451 = vpop.permute.xlu0 %450
        %452 = vrot.lane.b32.xlu0 %v447, 112
        %v453 = vpop.permute.xlu0 %452
        %v454 = vrot.slane %v451, 4
        %v455 = vsel %vm272, %v454, %v451
        %v456 = vsel %vm272, %v454, %v453
        %v459 = vadd.f32 %v433, %v455
        %v460 = vadd.f32 %v434, %v456
        %461 = vset.pattern.permute.xlu0 8
        %462 = vperm.xlu0 %461, %v328
        %v463 = vpop.permute.xlu0 %462
        %v465 = vunpack.c.l.s4 839922192
        %v466 = vunpack.c.0.s8 %v465
        %v467 = vlaneseq
        %v468 = vshrl.u32 %v467, 7
        %v469 = vsub.s32 %v466, %v468
        %v470 = vrot.slane %v463, %v469
        %v472 = vmul.f32 %v380, %v470
        %v473 = vmul.f32 %v381, %v470
        %476 = vrot.lane.b32.xlu0 %v472, 96
        %v477 = vpop.permute.xlu0 %476
        %478 = vrot.lane.b32.xlu0 %v473, 96
        %v479 = vpop.permute.xlu0 %478
        %v480 = vrot.slane %v477, 4
        %v481 = vsel %vm300, %v480, %v477
        %v482 = vsel %vm300, %v480, %v479
        %v485 = vadd.f32 %v459, %v481
        %v486 = vadd.f32 %v460, %v482
        %v488 = vlaneseq
        %v489 = vshrl.u32 %v488, 7
        %v490 = vsub.s32 0, %v489
        %v491 = vrot.slane %v232, %v490
        %v492 = vlaneseq
        %v493 = vshrl.u32 %v492, 7
        %v494 = vsub.s32 1, %v493
        %v495 = vrot.slane %v232, %v494
        %v496 = vcombine.low %v491, %v495
        %497 = vrot.lane.b32.xlu0 %v496, 113
        %v498 = vpop.permute.xlu0 %497
        %v499 = vrot.slane %v498, 4
        %vm500 = vcmask 924672
        %v501 = vsel %vm500, %v499, %v498
        %v504 = vmul.f32 %v485, %v501
        %v505 = vmul.f32 %v486, %v499
        %508 = vrot.lane.b32.xlu0 %v504, 126
        %v509 = vpop.permute.xlu0 %508
        %510 = vrot.lane.b32.xlu0 %v505, 126
        %v511 = vpop.permute.xlu0 %510
        %v512 = vrot.slane %v509, 4
        %v513 = vrot.slane %v511, 4
        %v514 = vsel %vm270, %v512, %v513
        %vm515 = vcmask 1031168
        %v516 = vsel %vm515, %v509, %v514
        %v519 = vadd.f32 %v420, %v516
        %v520 = vadd.f32 %v421, %v511
        %523 = vrot.lane.b32.xlu0 %v519, 17
        %v524 = vpop.permute.xlu0 %523
        %525 = vrot.lane.b32.xlu0 %v520, 17
        %v526 = vpop.permute.xlu0 %525
        %v527 = vrot.slane %v524, 4
        %v528 = vrot.slane %v526, 4
        %v529 = vsel %vm270, %v527, %v528
        %vm530 = vcmask 138240
        %v531 = vsel %vm530, %v524, %v529
        %533 = vst [vmem:[%s224] sm:$0xff] %v531
        %s534 = sand.u32 %s118, 1
        %s535 = scalar_lea.sflag [#allocation5], %s534
        %s536 = sand.u32 %s118, 1
        %s537 = smul.addr %s536, 8
        %s538 = scalar_lea.vmem [#allocation8], %s537
        // Predicated region
        $region41: #{tpu_custom_call.1} parent=31 // pred_check
          %p539 = pneg %p128
        $region42: #{tpu_custom_call.1} parent=31 // pred_check_branch
          %541 = sbr.rel (%p539) target = $region44
        $region43: #{tpu_custom_call.1} parent=31 // pred_region
          %s543 = ssub.s32 128, 128
          %544 = vsyncadd %s535, %s543
          %s545 = smul.addr %s26, 2
          %s546 = smul.addr %s25, 2
          %s547 = sadd.s32 %s545, %s546
          %s548 = smul.addr %s547, 64
          %s549 = scalar_lea.hbm %s3, %s548
          %s551 = sshll.u32 %s538, 4
          %s552 = int_to_ptr.vmem [resolvable:$true] %s551
          %554 = dma.vmem_to_hbm [thread:$0]  %s552, 128, %s549, %s535
        $region44: #{tpu_custom_call.1} parent=31 // pred_fallthru
          _
      $region32: #{tpu_custom_call.1} parent=5 // pred_fallthru
        _
      %p555 = scmp.le.s32.totalorder 2, %s16
      // Predicated region
      $region45: #{tpu_custom_call.1} parent=5 // pred_check
        %p556 = pneg %p555
      $region46: #{tpu_custom_call.1} parent=5 // pred_check_branch
        %558 = sbr.rel (%p556) target = $region48
      $region47: #{tpu_custom_call.1} parent=5 // pred_region
        %s559 = ssub.s32 %s16, 2
        // Predicated region
        $region49: #{tpu_custom_call.1} parent=47 // pred_check
          %p560 = pneg %p134
        $region50: #{tpu_custom_call.1} parent=47 // pred_check_branch
          %562 = sbr.rel (%p560) target = $region52
        $region51: #{tpu_custom_call.1} parent=47 // pred_region
          %s563 = sand.u32 %s119, 1
          %s564 = scalar_lea.sflag [#allocation5], %s563
          %s565 = sand.u32 %s119, 1
          %s566 = smul.addr %s565, 8
          %s567 = scalar_lea.vmem [#allocation8], %s566
          %568 = dma.done %s564, 128
        $region52: #{tpu_custom_call.1} parent=47 // pred_fallthru
          _
      $region48: #{tpu_custom_call.1} parent=5 // pred_fallthru
        _
    $region6: #{tpu_custom_call.1} parent=1 // loop_footer
      %s20 = sadd.s32 1, %s16
    $region7: #{tpu_custom_call.1} parent=1 // loop_footer_branch
      %15 = sbr.rel target = $region3
    $region8: #{tpu_custom_call.1} parent=1 // loop_exit
      _
    %569 = vsyncpa [#allocation4], 1
    %s570 = scalar_lea.sflag [#allocation4], 1
    %571 = vsyncpa %s570, 1
    %572 = vsyncpa [#allocation7], 1
    %573 = vsyncpa [#allocation5], 1
    %s574 = scalar_lea.sflag [#allocation5], 1
    %575 = vsyncpa %s574, 1

</llo_original>
